<compile_context>
chip_gen: v7x
topology: tpu7x:2x2x1
jax: 0.10.0
libtpu: 0.0.40
codegen_flags: <defaults>
</compile_context>

<pallas_src>
import jax
import jax.numpy as jnp
from jax import lax
from jax.experimental import pallas as pl
from jax.experimental.pallas import tpu as pltpu


def _round_up(x, m):
    return ((x + m - 1) // m) * m


# ------------------------------ Pallas kernels --------------------------------

def _make_bn_gelu_kernel(approximate_gelu):
    def kernel(p_ref, w_ref, ss_ref, o_ref):
        # conv-as-matmul on the MXU; bf16 operands, f32 accumulation.
        acc = jnp.dot(p_ref[...], w_ref[...], preferred_element_type=jnp.float32)
        # folded BatchNorm (eval): y = acc * scale + shift (row broadcast).
        y = acc * ss_ref[0:1, :] + ss_ref[1:2, :]
        if approximate_gelu:
            # tanh approximation -> EUP slot, genuinely overlaps the MXU.
            y = jax.nn.gelu(y, approximate=True)
        else:
            # exact GELU (erf), matches torch.nn.GELU default. Note: erf lowers to
            # a VALU polynomial (not EUP); acceptable since these layers are
            # HBM-bound, not VALU-bound.
            y = 0.5 * y * (1.0 + lax.erf(y * jnp.float32(0.7071067811865475)))
        o_ref[...] = y.astype(o_ref.dtype)
    return kernel


def _conv_bias_kernel(p_ref, w_ref, b_ref, o_ref):
    acc = jnp.dot(p_ref[...], w_ref[...], preferred_element_type=jnp.float32)
    o_ref[...] = (acc + b_ref[0:1, :]).astype(o_ref.dtype)


# ------------------------------ glue: im2col ----------------------------------

def _im2col(x_nchw, ksize, stride, padding, dilation, dtype):
    """x: [N, C, H, W] -> patches [N*Hout*Wout, C*kh*kw] (dtype), plus (Hout, Wout)."""
    N, C, H, W = x_nchw.shape
    kh, kw = ksize
    sh, sw = stride
    ph, pw = padding
    dh, dw = dilation
    Hout = (H + 2 * ph - dh * (kh - 1) - 1) // sh + 1
    Wout = (W + 2 * pw - dw * (kw - 1) - 1) // sw + 1
    x = x_nchw.astype(dtype)  # cast BEFORE the big materialization (half the bytes)
    xp = jnp.pad(x, ((0, 0), (0, 0), (ph, ph), (pw, pw)))
    cols = []
    for ki in range(kh):
        for kj in range(kw):
            h0 = ki * dh
            w0 = kj * dw
            cols.append(xp[:, :, h0: h0 + (Hout - 1) * sh + 1: sh,
                               w0: w0 + (Wout - 1) * sw + 1: sw])  # [N,C,Hout,Wout]
    stk = jnp.stack(cols, axis=0)                # [kh*kw, N, C, Hout, Wout]
    stk = jnp.transpose(stk, (1, 3, 4, 2, 0))    # [N, Hout, Wout, C, kh*kw]
    patches = stk.reshape(N * Hout * Wout, C * kh * kw)  # K ordered (c, ki, kj) = torch layout
    return patches, Hout, Wout


# ------------------------------- tiling plan -----------------------------------

def _plan_tiles(M, K, Cout_p, in_item=2, out_item=4, w_item=2):
    lane_K = _round_up(K, 128)   # VMEM lane padding of a bf16 patch tile
    sub_K = _round_up(K, 16)     # VMEM sublane padding of the bf16 weight
    try:
        vmem_cap = int(pltpu.get_tpu_info().vmem_capacity_bytes)
    except Exception:
        vmem_cap = 64 * 1024 * 1024   # conservative default (v7x per-core)
    budget = int(vmem_cap * 0.5)
    # Resident operands are still double-buffered by the pipeline even with a
    # constant index_map -> count them (weight + packed scale/shift).
    resident = 2 * sub_K * Cout_p * w_item + 2 * 8 * Cout_p * 4
    avail = max(budget - resident, 4 * 1024 * 1024)
    per_row = 2 * (lane_K * in_item + Cout_p * out_item)  # dbl-buffered in + out rows
    tm = (avail // per_row) // 16 * 16
    tm = max(16, min(8192, tm))
    if M >= 16:
        tm = min(tm, (M // 16) * 16)   # keep tm <= M (last tile is masked)
    # Keep total footprint under physical VMEM even for big weights.
    while tm > 16 and resident + tm * per_row > int(vmem_cap * 0.8):
        tm = max(16, (tm // 2) // 16 * 16)
    # TODO(synk): for very large K*Cout (deep layers) add an inner K grid axis
    # ("arbitrary") with an f32 accumulator scratch instead of shrinking tm.
    nt = -(-M // tm)
    # v7x megacore: prefer an even number of grid steps so both TCs stay busy.
    if nt > 1 and nt % 2 == 1:
        tm2 = _round_up(-(-M // (nt + 1)), 16)
        if 16 <= tm2 <= tm:
            tm = tm2
            nt = -(-M // tm)
    usage = resident + tm * per_row
    vmem_limit = int(min(vmem_cap, max(usage + 8 * 1024 * 1024, 32 * 1024 * 1024)))
    return tm, nt, vmem_limit


def _tiled_matmul_epilogue(patches, w2d, row_block, kernel_fn, M, K, Cout, Cout_p,
                           out_dtype):
    tm, nt, vmem_limit = _plan_tiles(M, K, Cout_p)
    n_rows = row_block.shape[0]
    out_flat = pl.pallas_call(
        kernel_fn,
        out_shape=jax.ShapeDtypeStruct((M, Cout_p), out_dtype),
        grid=(nt,),
        in_specs=[
            pl.BlockSpec((tm, K), lambda i: (i, 0)),            # streamed bf16 patches
            pl.BlockSpec((K, Cout_p), lambda i: (0, 0)),        # resident bf16 weight
            pl.BlockSpec((n_rows, Cout_p), lambda i: (0, 0)),   # resident epilogue vecs
        ],
        out_specs=pl.BlockSpec((tm, Cout_p), lambda i: (i, 0)),
        compiler_params=pltpu.CompilerParams(
            dimension_semantics=("parallel",),   # shard M grid across TCs (v7x)
            vmem_limit_bytes=vmem_limit,
        ),
    )(patches, w2d, row_block)
    return out_flat[:, :Cout]


# --------------------------------- forward -------------------------------------

def conv_forward(x, weight, *, stride, padding, dilation=(1, 1), groups=1,
                 bias=None, bn_acti=False, bn_params=None, eps=1e-3,
                 approximate_gelu=False, channels_last_out=False,
                 out_dtype=jnp.float32):
    """Matches Conv.forward (eval mode).

    x:      [N, Cin, H, W]  float32 (NCHW, like PyTorch)
    weight: [Cout, Cin, kh, kw]
    bn_params: (gamma, beta, running_mean, running_var) each [Cout] if bn_acti
    returns [N, Cout, Hout, Wout] (or NHWC if channels_last_out=True)
    """
    assert groups == 1  # TODO(synk): grouped conv not implemented (module default groups=1)
    N, Cin, H, W = x.shape
    Cout, _, kh, kw = weight.shape

    # TODO(synk): im2col is still materialized (kh*kw read amplification on the
    # activations); fully fusing patch extraction (NHWC input left in HBM, manual
    # halo DMA per output-row tile) is the remaining structural improvement.
    patches, Hout, Wout = _im2col(x, (kh, kw), stride, padding, dilation, jnp.bfloat16)
    M, K = patches.shape

    Cout_p = _round_up(Cout, 128)  # lane-dense output stores
    # weight [Cout, Cin, kh, kw] -> [K, Cout_p] bf16, K ordered (c, ki, kj)
    w2d = jnp.transpose(weight.reshape(Cout, K), (1, 0)).astype(jnp.bfloat16)
    w2d = jnp.pad(w2d, ((0, 0), (0, Cout_p - Cout)))

    if bn_acti:
        gamma, beta, rmean, rvar = bn_params
        scale = (gamma / jnp.sqrt(rvar + eps)).astype(jnp.float32)
        shift = (beta - rmean * scale).astype(jnp.float32)
        if bias is not None:
            shift = shift + bias.astype(jnp.float32) * scale
        ss = jnp.stack([scale, shift], axis=0)                  # (2, Cout)
        ss = jnp.pad(ss, ((0, 0), (0, Cout_p - Cout)))
        out_flat = _tiled_matmul_epilogue(
            patches, w2d, ss, _make_bn_gelu_kernel(approximate_gelu),
            M, K, Cout, Cout_p, out_dtype)
    else:
        b = bias if bias is not None else jnp.zeros((Cout,), jnp.float32)
        b = jnp.pad(b.astype(jnp.float32).reshape(1, Cout), ((0, 0), (0, Cout_p - Cout)))
        out_flat = _tiled_matmul_epilogue(
            patches, w2d, b, _conv_bias_kernel, M, K, Cout, Cout_p, out_dtype)

    # Dropout2d(p=0.001): identity in eval mode.
    # TODO(synk): training-mode channel dropout not implemented (eval semantics only).

    out = out_flat.reshape(N, Hout, Wout, Cout)
    if channels_last_out:
        # keep channels-last between layers; convert only at the model boundary.
        return out
    return jnp.transpose(out, (0, 3, 1, 2))


# ------------------------------ pure-JAX reference ------------------------------

def _reference(x, weight, stride, padding, dilation, gamma, beta, rmean, rvar, eps):
    out = lax.conv_general_dilated(
        x, weight, window_strides=stride,
        padding=[(padding[0], padding[0]), (padding[1], padding[1])],
        rhs_dilation=dilation,
        dimension_numbers=("NCHW", "OIHW", "NCHW"))
    scale = gamma / jnp.sqrt(rvar + eps)
    shift = beta - rmean * scale
    out = out * scale[None, :, None, None] + shift[None, :, None, None]
    return 0.5 * out * (1.0 + lax.erf(out * jnp.float32(0.7071067811865475)))


if __name__ == "__main__":
    # Conv(nIn=4, nOut=8, kSize=3, stride=1, padding=1, bn_acti=True, bias=False)
    key = jax.random.PRNGKey(0)
    k_x, k_w, k_g, k_b, k_m, k_v = jax.random.split(key, 6)

    N, Cin, H, W = 2, 4, 16, 16
    Cout, kh, kw = 8, 3, 3

    x = jax.random.normal(k_x, (N, Cin, H, W), dtype=jnp.float32)
    weight = 0.1 * jax.random.normal(k_w, (Cout, Cin, kh, kw), dtype=jnp.float32)
    gamma = 1.0 + 0.1 * jax.random.normal(k_g, (Cout,), dtype=jnp.float32)
    beta = 0.1 * jax.random.normal(k_b, (Cout,), dtype=jnp.float32)
    rmean = 0.1 * jax.random.normal(k_m, (Cout,), dtype=jnp.float32)
    rvar = jnp.abs(1.0 + 0.1 * jax.random.normal(k_v, (Cout,), dtype=jnp.float32))

    out = conv_forward(
        x, weight,
        stride=(1, 1), padding=(1, 1), dilation=(1, 1), groups=1,
        bias=None, bn_acti=True,
        bn_params=(gamma, beta, rmean, rvar), eps=1e-3,
    )
    out = jax.block_until_ready(out)
    assert out.shape == (N, Cout, H, W), out.shape
    assert bool(jnp.all(jnp.isfinite(out)))

    # f32 reference (bf16 MXU operands, f32 accumulation -> loose tolerance)
    ref = _reference(x, weight, (1, 1), (1, 1), (1, 1), gamma, beta, rmean, rvar, 1e-3)
    max_err = float(jnp.max(jnp.abs(out - ref)))
    assert max_err < 5e-2, f"max abs err {max_err}"

    print("KERNEL_OK")
</pallas_src>

<mosaic_0001>
module attributes {stable_mosaic.version = 11 : i64} {
  func.func @kernel(%arg0: i32, %arg1: memref<512x36xbf16, #tpu.memory_space<vmem>>, %arg2: memref<36x128xbf16, #tpu.memory_space<vmem>>, %arg3: memref<2x128xf32, #tpu.memory_space<vmem>>, %arg4: memref<512x128xf32, #tpu.memory_space<vmem>>) attributes {dimension_semantics = [#tpu.dimension_semantics<parallel>], iteration_bounds = array<i64: 1>, scalar_prefetch = 0 : i64, scratch_operands = 0 : i64, tpu.core_type = #tpu.core_type<tc>, window_params = [{transform_indices = @transform_0, window_bounds = array<i64: 512, 36>}, {pipeline_mode = #tpu.pipeline_mode<synchronous>, transform_indices = @transform_1, window_bounds = array<i64: 36, 128>}, {pipeline_mode = #tpu.pipeline_mode<synchronous>, transform_indices = @transform_2, window_bounds = array<i64: 2, 128>}, {transform_indices = @transform_3, window_bounds = array<i64: 512, 128>}]} {
    %c0 = arith.constant 0 : index
    %c0_0 = arith.constant 0 : index
    %0 = vector.load %arg1[%c0, %c0_0] : memref<512x36xbf16, #tpu.memory_space<vmem>>, vector<512x36xbf16>
    %c0_1 = arith.constant 0 : index
    %c0_2 = arith.constant 0 : index
    %1 = vector.load %arg2[%c0_1, %c0_2] : memref<36x128xbf16, #tpu.memory_space<vmem>>, vector<36x128xbf16>
    %cst = arith.constant dense<0.000000e+00> : vector<512x128xf32>
    %2 = tpu.matmul %0, %1, %cst {dimension_numbers = #tpu.dot_dimension_numbers<[1], [0], [0], [1], [0, 0, 1, 1], [], []>} : vector<512x36xbf16>, vector<36x128xbf16>, vector<512x128xf32> -> vector<512x128xf32>
    %c0_3 = arith.constant 0 : index
    %c0_4 = arith.constant 0 : index
    %3 = vector.load %arg3[%c0_3, %c0_4] : memref<2x128xf32, #tpu.memory_space<vmem>>, vector<1x128xf32>
    %4 = vector.broadcast %3 : vector<1x128xf32> to vector<512x128xf32>
    %5 = arith.mulf %2, %4 : vector<512x128xf32>
    %c1 = arith.constant 1 : index
    %c0_5 = arith.constant 0 : index
    %6 = vector.load %arg3[%c1, %c0_5] : memref<2x128xf32, #tpu.memory_space<vmem>>, vector<1x128xf32>
    %7 = vector.broadcast %6 : vector<1x128xf32> to vector<512x128xf32>
    %8 = arith.addf %5, %7 : vector<512x128xf32>
    %cst_6 = arith.constant 5.000000e-01 : f32
    %9 = vector.broadcast %cst_6 : f32 to vector<512x128xf32>
    %10 = arith.mulf %9, %8 : vector<512x128xf32>
    %cst_7 = arith.constant 0.707106769 : f32
    %11 = vector.broadcast %cst_7 : f32 to vector<512x128xf32>
    %12 = arith.mulf %8, %11 : vector<512x128xf32>
    %13 = math.erf %12 : vector<512x128xf32>
    %cst_8 = arith.constant 1.000000e+00 : f32
    %14 = vector.broadcast %cst_8 : f32 to vector<512x128xf32>
    %15 = arith.addf %14, %13 : vector<512x128xf32>
    %16 = arith.mulf %10, %15 : vector<512x128xf32>
    %c0_9 = arith.constant 0 : index
    %c0_10 = arith.constant 0 : index
    %17 = vector.load %arg4[%c0_9, %c0_10] : memref<512x128xf32, #tpu.memory_space<vmem>>, vector<512x128xf32>
    tpu.vector_store %arg4[%c0_9, %c0_10], %16 {strides = array<i32>} : memref<512x128xf32, #tpu.memory_space<vmem>>, vector<512x128xf32>,
    return
  }
  func.func @transform_0(%arg0: i32) -> (i32, i32) {
    %c0_i32 = arith.constant 0 : i32
    %c0_i32_0 = arith.constant 0 : i32
    return %arg0, %c0_i32 : i32, i32
  }
  func.func @transform_1(%arg0: i32) -> (i32, i32) {
    %c0_i32 = arith.constant 0 : i32
    %c0_i32_0 = arith.constant 0 : i32
    %c0_i32_1 = arith.constant 0 : i32
    return %c0_i32, %c0_i32_0 : i32, i32
  }
  func.func @transform_2(%arg0: i32) -> (i32, i32) {
    %c0_i32 = arith.constant 0 : i32
    %c0_i32_0 = arith.constant 0 : i32
    %c0_i32_1 = arith.constant 0 : i32
    return %c0_i32, %c0_i32_0 : i32, i32
  }
  func.func @transform_3(%arg0: i32) -> (i32, i32) {
    %c0_i32 = arith.constant 0 : i32
    %c0_i32_0 = arith.constant 0 : i32
    return %arg0, %c0_i32 : i32, i32
  }
}

</mosaic_0001>

<llo_original>
// kernel: tpu_custom_call.1
$region0: #{tpu_custom_call.1}
  #allocation0 [shape = 'u32[]', space=smem, size = 0x4, offset = 0x4, fixed_abs, tag = 'smem constant byte address 0x4 - core index']
  #allocation1 [shape = 'u32[144,128]{1,0:T(1,128)}', space=vmem, size = 0x12000, scoped, tag = 'internal scratch']
  %s0 = inlined_call_operand.vmem [shape: bf16[512,36], index: 0, kind: input, shape index: {}]
  %s1 = inlined_call_operand.vmem [shape: bf16[36,128], index: 1, kind: input, shape index: {}]
  %s2 = inlined_call_operand.vmem [shape: f32[2,128], index: 2, kind: input, shape index: {}]
  %s3 = inlined_call_operand.hbm [shape: f32[512,128], index: 3, kind: output, shape index: {}]
  %s4 = sld [smem:[#allocation0]]
  $region22: #{tpu_custom_call.1} parent=0
    _
  %s6 = ssub.s32 1, %s4
  %s7 = scalar_select 0, %s6, %s4
  $region1: #{tpu_custom_call.1} parent=0
    #allocation2 [shape = 'u8[262144]{0}', space=vmem, size = 0x40000, scoped, tag = 'output window, operand 0, single buffered']
    #allocation3 [shape = 's32[1]{0}', space=sflag, size = 0x4, scoped, tag = 'scoped memory for tpu_custom_call.1']
    %8 = vsyncpa [#allocation3], 0
    // Predicated region
    $region2: #{tpu_custom_call.1} parent=1 // pred_check
      _
    $region3: #{tpu_custom_call.1} parent=1 // pred_check_branch
      %10 = sbr.rel (0) target = $region5
    $region4: #{tpu_custom_call.1} parent=1 // pred_region
      _
    $region5: #{tpu_custom_call.1} parent=1 // pred_fallthru
      _
    // Predicated region
    $region6: #{tpu_custom_call.1} parent=1 // pred_check
      _
    $region7: #{tpu_custom_call.1} parent=1 // pred_check_branch
      %12 = sbr.rel (0) target = $region9
    $region8: #{tpu_custom_call.1} parent=1 // pred_region
      _
    $region9: #{tpu_custom_call.1} parent=1 // pred_fallthru
      _
    // Predicated region
    $region10: #{tpu_custom_call.1} parent=1 // pred_check
      _
    $region11: #{tpu_custom_call.1} parent=1 // pred_check_branch
      %14 = sbr.rel (0) target = $region13
    $region12: #{tpu_custom_call.1} parent=1 // pred_region
      _
    $region13: #{tpu_custom_call.1} parent=1 // pred_fallthru
      _
    %v16 = vld [vmem:[%s0] sm:$0xf]
    %v17 = vld [vmem:[%s0 + $0x4] sm:$0xf]
    %v18 = vld [vmem:[%s0 + $0x8] sm:$0xf]
    %v19 = vld [vmem:[%s0 + $0xc] sm:$0xf]
    %v20 = vld [vmem:[%s0 + $0x10] sm:$0xf]
    %v21 = vld [vmem:[%s0 + $0x14] sm:$0xf]
    %v22 = vld [vmem:[%s0 + $0x18] sm:$0xf]
    %v23 = vld [vmem:[%s0 + $0x1c] sm:$0xf]
    %v24 = vld [vmem:[%s0 + $0x20] sm:$0xf]
    %v25 = vld [vmem:[%s0 + $0x24] sm:$0xf]
    %v26 = vld [vmem:[%s0 + $0x28] sm:$0xf]
    %v27 = vld [vmem:[%s0 + $0x2c] sm:$0xf]
    %v28 = vld [vmem:[%s0 + $0x30] sm:$0xf]
    %v29 = vld [vmem:[%s0 + $0x34] sm:$0xf]
    %v30 = vld [vmem:[%s0 + $0x38] sm:$0xf]
    %v31 = vld [vmem:[%s0 + $0x3c] sm:$0xf]
    %v32 = vld [vmem:[%s0 + $0x40] sm:$0xf]
    %v33 = vld [vmem:[%s0 + $0x44] sm:$0xf]
    %v34 = vld [vmem:[%s0 + $0x48] sm:$0xf]
    %v35 = vld [vmem:[%s0 + $0x4c] sm:$0xf]
    %v36 = vld [vmem:[%s0 + $0x50] sm:$0xf]
    %v37 = vld [vmem:[%s0 + $0x54] sm:$0xf]
    %v38 = vld [vmem:[%s0 + $0x58] sm:$0xf]
    %v39 = vld [vmem:[%s0 + $0x5c] sm:$0xf]
    %v40 = vld [vmem:[%s0 + $0x60] sm:$0xf]
    %v41 = vld [vmem:[%s0 + $0x64] sm:$0xf]
    %v42 = vld [vmem:[%s0 + $0x68] sm:$0xf]
    %v43 = vld [vmem:[%s0 + $0x6c] sm:$0xf]
    %v44 = vld [vmem:[%s0 + $0x70] sm:$0xf]
    %v45 = vld [vmem:[%s0 + $0x74] sm:$0xf]
    %v46 = vld [vmem:[%s0 + $0x78] sm:$0xf]
    %v47 = vld [vmem:[%s0 + $0x7c] sm:$0xf]
    %v48 = vld [vmem:[%s0 + $0x80] sm:$0xf]
    %v49 = vld [vmem:[%s0 + $0x84] sm:$0xf]
    %v50 = vld [vmem:[%s0 + $0x88] sm:$0xf]
    %v51 = vld [vmem:[%s0 + $0x8c] sm:$0xf]
    %v52 = vld [vmem:[%s0 + $0x90] sm:$0xf]
    %v53 = vld [vmem:[%s0 + $0x94] sm:$0xf]
    %v54 = vld [vmem:[%s0 + $0x98] sm:$0xf]
    %v55 = vld [vmem:[%s0 + $0x9c] sm:$0xf]
    %v56 = vld [vmem:[%s0 + $0xa0] sm:$0xf]
    %v57 = vld [vmem:[%s0 + $0xa4] sm:$0xf]
    %v58 = vld [vmem:[%s0 + $0xa8] sm:$0xf]
    %v59 = vld [vmem:[%s0 + $0xac] sm:$0xf]
    %v60 = vld [vmem:[%s0 + $0xb0] sm:$0xf]
    %v61 = vld [vmem:[%s0 + $0xb4] sm:$0xf]
    %v62 = vld [vmem:[%s0 + $0xb8] sm:$0xf]
    %v63 = vld [vmem:[%s0 + $0xbc] sm:$0xf]
    %v64 = vld [vmem:[%s0 + $0xc0] sm:$0xf]
    %v65 = vld [vmem:[%s0 + $0xc4] sm:$0xf]
    %v66 = vld [vmem:[%s0 + $0xc8] sm:$0xf]
    %v67 = vld [vmem:[%s0 + $0xcc] sm:$0xf]
    %v68 = vld [vmem:[%s0 + $0xd0] sm:$0xf]
    %v69 = vld [vmem:[%s0 + $0xd4] sm:$0xf]
    %v70 = vld [vmem:[%s0 + $0xd8] sm:$0xf]
    %v71 = vld [vmem:[%s0 + $0xdc] sm:$0xf]
    %v72 = vld [vmem:[%s0 + $0xe0] sm:$0xf]
    %v73 = vld [vmem:[%s0 + $0xe4] sm:$0xf]
    %v74 = vld [vmem:[%s0 + $0xe8] sm:$0xf]
    %v75 = vld [vmem:[%s0 + $0xec] sm:$0xf]
    %v76 = vld [vmem:[%s0 + $0xf0] sm:$0xf]
    %v77 = vld [vmem:[%s0 + $0xf4] sm:$0xf]
    %v78 = vld [vmem:[%s0 + $0xf8] sm:$0xf]
    %v79 = vld [vmem:[%s0 + $0xfc] sm:$0xf]
    %v80 = vld [vmem:[%s1] sm:$0xf]
    %v81 = vld [vmem:[%s1 + $0x4] sm:$0xf]
    %v82 = vld [vmem:[%s1 + $0x8] sm:$0xf]
    %v83 = vld [vmem:[%s1 + $0xc] sm:$0xf]
    %v84 = vld [vmem:[%s1 + $0x10] sm:$0x3]
    %v149 = vunpack.c.l.b16 %v16
    %v150 = vunpack.c.l.b16 %v17
    %v151 = vunpack.c.l.b16 %v18
    %v152 = vunpack.c.l.b16 %v19
    %v153 = vunpack.c.l.b16 %v20
    %v154 = vunpack.c.l.b16 %v21
    %v155 = vunpack.c.l.b16 %v22
    %v156 = vunpack.c.l.b16 %v23
    %v157 = vunpack.c.l.b16 %v24
    %v158 = vunpack.c.l.b16 %v25
    %v159 = vunpack.c.l.b16 %v26
    %v160 = vunpack.c.l.b16 %v27
    %v161 = vunpack.c.l.b16 %v28
    %v162 = vunpack.c.l.b16 %v29
    %v163 = vunpack.c.l.b16 %v30
    %v164 = vunpack.c.l.b16 %v31
    %v165 = vunpack.c.l.b16 %v32
    %v166 = vunpack.c.l.b16 %v33
    %v167 = vunpack.c.l.b16 %v34
    %v168 = vunpack.c.l.b16 %v35
    %v169 = vunpack.c.l.b16 %v36
    %v170 = vunpack.c.l.b16 %v37
    %v171 = vunpack.c.l.b16 %v38
    %v172 = vunpack.c.l.b16 %v39
    %v173 = vunpack.c.l.b16 %v40
    %v174 = vunpack.c.l.b16 %v41
    %v175 = vunpack.c.l.b16 %v42
    %v176 = vunpack.c.l.b16 %v43
    %v177 = vunpack.c.l.b16 %v44
    %v178 = vunpack.c.l.b16 %v45
    %v179 = vunpack.c.l.b16 %v46
    %v180 = vunpack.c.l.b16 %v47
    %v181 = vunpack.c.l.b16 %v48
    %v182 = vunpack.c.l.b16 %v49
    %v183 = vunpack.c.l.b16 %v50
    %v184 = vunpack.c.l.b16 %v51
    %v185 = vunpack.c.l.b16 %v52
    %v186 = vunpack.c.l.b16 %v53
    %v187 = vunpack.c.l.b16 %v54
    %v188 = vunpack.c.l.b16 %v55
    %v189 = vunpack.c.l.b16 %v56
    %v190 = vunpack.c.l.b16 %v57
    %v191 = vunpack.c.l.b16 %v58
    %v192 = vunpack.c.l.b16 %v59
    %v193 = vunpack.c.l.b16 %v60
    %v194 = vunpack.c.l.b16 %v61
    %v195 = vunpack.c.l.b16 %v62
    %v196 = vunpack.c.l.b16 %v63
    %v197 = vunpack.c.l.b16 %v64
    %v198 = vunpack.c.l.b16 %v65
    %v199 = vunpack.c.l.b16 %v66
    %v200 = vunpack.c.l.b16 %v67
    %v201 = vunpack.c.l.b16 %v68
    %v202 = vunpack.c.l.b16 %v69
    %v203 = vunpack.c.l.b16 %v70
    %v204 = vunpack.c.l.b16 %v71
    %v205 = vunpack.c.l.b16 %v72
    %v206 = vunpack.c.l.b16 %v73
    %v207 = vunpack.c.l.b16 %v74
    %v208 = vunpack.c.l.b16 %v75
    %v209 = vunpack.c.l.b16 %v76
    %v210 = vunpack.c.l.b16 %v77
    %v211 = vunpack.c.l.b16 %v78
    %v212 = vunpack.c.l.b16 %v79
    %v213 = vpack.c.b16 %v150, %v149
    %v214 = vpack.c.b16 %v152, %v151
    %v215 = vpack.c.b16 %v154, %v153
    %v216 = vpack.c.b16 %v156, %v155
    %v217 = vpack.c.b16 %v158, %v157
    %v218 = vpack.c.b16 %v160, %v159
    %v219 = vpack.c.b16 %v162, %v161
    %v220 = vpack.c.b16 %v164, %v163
    %v221 = vpack.c.b16 %v166, %v165
    %v222 = vpack.c.b16 %v168, %v167
    %v223 = vpack.c.b16 %v170, %v169
    %v224 = vpack.c.b16 %v172, %v171
    %v225 = vpack.c.b16 %v174, %v173
    %v226 = vpack.c.b16 %v176, %v175
    %v227 = vpack.c.b16 %v178, %v177
    %v228 = vpack.c.b16 %v180, %v179
    %v229 = vpack.c.b16 %v182, %v181
    %v230 = vpack.c.b16 %v184, %v183
    %v231 = vpack.c.b16 %v186, %v185
    %v232 = vpack.c.b16 %v188, %v187
    %v233 = vpack.c.b16 %v190, %v189
    %v234 = vpack.c.b16 %v192, %v191
    %v235 = vpack.c.b16 %v194, %v193
    %v236 = vpack.c.b16 %v196, %v195
    %v237 = vpack.c.b16 %v198, %v197
    %v238 = vpack.c.b16 %v200, %v199
    %v239 = vpack.c.b16 %v202, %v201
    %v240 = vpack.c.b16 %v204, %v203
    %v241 = vpack.c.b16 %v206, %v205
    %v242 = vpack.c.b16 %v208, %v207
    %v243 = vpack.c.b16 %v210, %v209
    %v244 = vpack.c.b16 %v212, %v211
    %v250 = vunpack.c.l.b16 %v80
    %v251 = vunpack.c.l.b16 %v81
    %v252 = vunpack.c.l.b16 %v82
    %v253 = vunpack.c.l.b16 %v83
    %v254 = vunpack.c.l.b16 %v84
    %v255 = vpack.c.b16 %v251, %v250
    %v256 = vpack.c.b16 %v253, %v252
    %v257 = vpack.c.b16 %v254, %v254
    %vm260 = vcmask 293888
    %v262 = vsel %vm260, %v213, 0
    %v265 = vsel %vm260, %v214, 0
    %v268 = vsel %vm260, %v215, 0
    %v271 = vsel %vm260, %v216, 0
    %v274 = vsel %vm260, %v217, 0
    %v277 = vsel %vm260, %v218, 0
    %v280 = vsel %vm260, %v219, 0
    %v283 = vsel %vm260, %v220, 0
    %v286 = vsel %vm260, %v221, 0
    %v289 = vsel %vm260, %v222, 0
    %v292 = vsel %vm260, %v223, 0
    %v295 = vsel %vm260, %v224, 0
    %v298 = vsel %vm260, %v225, 0
    %v301 = vsel %vm260, %v226, 0
    %v304 = vsel %vm260, %v227, 0
    %v307 = vsel %vm260, %v228, 0
    %v310 = vsel %vm260, %v229, 0
    %v313 = vsel %vm260, %v230, 0
    %v316 = vsel %vm260, %v231, 0
    %v319 = vsel %vm260, %v232, 0
    %v322 = vsel %vm260, %v233, 0
    %v325 = vsel %vm260, %v234, 0
    %v328 = vsel %vm260, %v235, 0
    %v331 = vsel %vm260, %v236, 0
    %v334 = vsel %vm260, %v237, 0
    %v337 = vsel %vm260, %v238, 0
    %v340 = vsel %vm260, %v239, 0
    %v343 = vsel %vm260, %v240, 0
    %v346 = vsel %vm260, %v241, 0
    %v349 = vsel %vm260, %v242, 0
    %v352 = vsel %vm260, %v243, 0
    %v355 = vsel %vm260, %v244, 0
    %vm357 = vcmask 1041408
    %v359 = vsel %vm357, %v257, 0
    %361 = vmatprep.subr.bf16.mxu0 0
    %362 = vmatpush1.bf16.msra.mxu0 %v255
    %363 = vmatprep.subr.bf16.mxu0 0
    %364 = vmatpush1.bf16.msra.mxu0 %v256
    %365 = vmatprep.subr.bf16.mxu0 0
    %366 = vmatpush1.bf16.msra.mxu0 %v359
    %367 = vmatprep.subr.bf16.mxu0 0
    %368 = vmatpush1.bf16.msra.mxu0 0
    %369 = vmatprep.subr.bf16.mxu0 0
    %370 = vmatpush1.bf16.msra.mxu0 0
    %371 = vmatprep.subr.bf16.mxu0 0
    %372 = vmatpush1.bf16.msra.mxu0 0
    %373 = vmatprep.subr.bf16.mxu0 0
    %374 = vmatpush1.bf16.msra.mxu0 0
    %375 = vmatprep.subr.bf16.mxu0 0
    %376 = vmatpush1.bf16.msra.mxu0 0
    %377 = vmatprep.subr.bf16.mxu0 0
    %378 = vmatpush1.bf16.msra.mxu0 0
    %379 = vmatprep.subr.bf16.mxu0 0
    %380 = vmatpush1.bf16.msra.mxu0 0
    %381 = vmatprep.subr.bf16.mxu0 0
    %382 = vmatpush1.bf16.msra.mxu0 0
    %383 = vmatprep.subr.bf16.mxu0 0
    %384 = vmatpush1.bf16.msra.mxu0 0
    %385 = vmatprep.subr.bf16.mxu0 0
    %386 = vmatpush1.bf16.msra.mxu0 0
    %387 = vmatprep.subr.bf16.mxu0 0
    %388 = vmatpush1.bf16.msra.mxu0 0
    %389 = vmatprep.subr.bf16.mxu0 0
    %390 = vmatpush1.bf16.msra.mxu0 0
    %391 = vmatprep.subr.bf16.mxu0 0
    %392 = vmatpush1.bf16.msra.mxu0 0
    %393 = vmatprep.mubr.bf16.mxu0 0
    %394 = vmatmul.mubr.bf16.gmra.mrb[0].mxu0 %v262
    %v395 = vpop.f32.mrb[0].mxu0
    %v396 = vadd.f32 0.0, %v395
    %v397 = vpop.f32.mrb[0].mxu0
    %v398 = vpop.f32.mrb[0].mxu0
    %v399 = vadd.f32 0.0, %v398
    %v400 = vpop.f32.mrb[0].mxu0
    %401 = vmatprep.mubr.bf16.mxu0 0
    %402 = vmatmul.mubr.bf16.gmra.mrb[0].mxu0 %v265
    %v403 = vpop.f32.mrb[0].mxu0
    %v404 = vadd.f32 0.0, %v403
    %v405 = vpop.f32.mrb[0].mxu0
    %v406 = vpop.f32.mrb[0].mxu0
    %v407 = vadd.f32 0.0, %v406
    %v408 = vpop.f32.mrb[0].mxu0
    %409 = vmatprep.mubr.bf16.mxu0 0
    %410 = vmatmul.mubr.bf16.gmra.mrb[0].mxu0 %v268
    %v411 = vpop.f32.mrb[0].mxu0
    %v412 = vadd.f32 0.0, %v411
    %v413 = vpop.f32.mrb[0].mxu0
    %v414 = vpop.f32.mrb[0].mxu0
    %v415 = vadd.f32 0.0, %v414
    %v416 = vpop.f32.mrb[0].mxu0
    %417 = vmatprep.mubr.bf16.mxu0 0
    %418 = vmatmul.mubr.bf16.gmra.mrb[0].mxu0 %v271
    %v419 = vpop.f32.mrb[0].mxu0
    %v420 = vadd.f32 0.0, %v419
    %v421 = vpop.f32.mrb[0].mxu0
    %v422 = vpop.f32.mrb[0].mxu0
    %v423 = vadd.f32 0.0, %v422
    %v424 = vpop.f32.mrb[0].mxu0
    %425 = vmatprep.mubr.bf16.mxu0 0
    %426 = vmatmul.mubr.bf16.gmra.mrb[0].mxu0 %v274
    %v427 = vpop.f32.mrb[0].mxu0
    %v428 = vadd.f32 0.0, %v427
    %v429 = vpop.f32.mrb[0].mxu0
    %v430 = vpop.f32.mrb[0].mxu0
    %v431 = vadd.f32 0.0, %v430
    %v432 = vpop.f32.mrb[0].mxu0
    %433 = vmatprep.mubr.bf16.mxu0 0
    %434 = vmatmul.mubr.bf16.gmra.mrb[0].mxu0 %v277
    %v435 = vpop.f32.mrb[0].mxu0
    %v436 = vadd.f32 0.0, %v435
    %v437 = vpop.f32.mrb[0].mxu0
    %v438 = vpop.f32.mrb[0].mxu0
    %v439 = vadd.f32 0.0, %v438
    %v440 = vpop.f32.mrb[0].mxu0
    %441 = vmatprep.mubr.bf16.mxu0 0
    %442 = vmatmul.mubr.bf16.gmra.mrb[0].mxu0 %v280
    %v443 = vpop.f32.mrb[0].mxu0
    %v444 = vadd.f32 0.0, %v443
    %v445 = vpop.f32.mrb[0].mxu0
    %v446 = vpop.f32.mrb[0].mxu0
    %v447 = vadd.f32 0.0, %v446
    %v448 = vpop.f32.mrb[0].mxu0
    %449 = vmatprep.mubr.bf16.mxu0 0
    %450 = vmatmul.mubr.bf16.gmra.mrb[0].mxu0 %v283
    %v451 = vpop.f32.mrb[0].mxu0
    %v452 = vadd.f32 0.0, %v451
    %v453 = vpop.f32.mrb[0].mxu0
    %v454 = vpop.f32.mrb[0].mxu0
    %v455 = vadd.f32 0.0, %v454
    %v456 = vpop.f32.mrb[0].mxu0
    %457 = vmatprep.mubr.bf16.mxu0 0
    %458 = vmatmul.mubr.bf16.gmra.mrb[0].mxu0 %v286
    %v459 = vpop.f32.mrb[0].mxu0
    %v460 = vadd.f32 0.0, %v459
    %v461 = vpop.f32.mrb[0].mxu0
    %v462 = vpop.f32.mrb[0].mxu0
    %v463 = vadd.f32 0.0, %v462
    %v464 = vpop.f32.mrb[0].mxu0
    %465 = vmatprep.mubr.bf16.mxu0 0
    %466 = vmatmul.mubr.bf16.gmra.mrb[0].mxu0 %v289
    %v467 = vpop.f32.mrb[0].mxu0
    %v468 = vadd.f32 0.0, %v467
    %v469 = vpop.f32.mrb[0].mxu0
    %v470 = vpop.f32.mrb[0].mxu0
    %v471 = vadd.f32 0.0, %v470
    %v472 = vpop.f32.mrb[0].mxu0
    %473 = vmatprep.mubr.bf16.mxu0 0
    %474 = vmatmul.mubr.bf16.gmra.mrb[0].mxu0 %v292
    %v475 = vpop.f32.mrb[0].mxu0
    %v476 = vadd.f32 0.0, %v475
    %v477 = vpop.f32.mrb[0].mxu0
    %v478 = vpop.f32.mrb[0].mxu0
    %v479 = vadd.f32 0.0, %v478
    %v480 = vpop.f32.mrb[0].mxu0
    %481 = vmatprep.mubr.bf16.mxu0 0
    %482 = vmatmul.mubr.bf16.gmra.mrb[0].mxu0 %v295
    %v483 = vpop.f32.mrb[0].mxu0
    %v484 = vadd.f32 0.0, %v483
    %v485 = vpop.f32.mrb[0].mxu0
    %v486 = vpop.f32.mrb[0].mxu0
    %v487 = vadd.f32 0.0, %v486
    %v488 = vpop.f32.mrb[0].mxu0
    %489 = vmatprep.mubr.bf16.mxu0 0
    %490 = vmatmul.mubr.bf16.gmra.mrb[0].mxu0 %v298
    %v491 = vpop.f32.mrb[0].mxu0
    %v492 = vadd.f32 0.0, %v491
    %v493 = vpop.f32.mrb[0].mxu0
    %v494 = vpop.f32.mrb[0].mxu0
    %v495 = vadd.f32 0.0, %v494
    %v496 = vpop.f32.mrb[0].mxu0
    %497 = vmatprep.mubr.bf16.mxu0 0
    %498 = vmatmul.mubr.bf16.gmra.mrb[0].mxu0 %v301
    %v499 = vpop.f32.mrb[0].mxu0
    %v500 = vadd.f32 0.0, %v499
    %v501 = vpop.f32.mrb[0].mxu0
    %v502 = vpop.f32.mrb[0].mxu0
    %v503 = vadd.f32 0.0, %v502
    %v504 = vpop.f32.mrb[0].mxu0
    %505 = vmatprep.mubr.bf16.mxu0 0
    %506 = vmatmul.mubr.bf16.gmra.mrb[0].mxu0 %v304
    %v507 = vpop.f32.mrb[0].mxu0
    %v508 = vadd.f32 0.0, %v507
    %v509 = vpop.f32.mrb[0].mxu0
    %v510 = vpop.f32.mrb[0].mxu0
    %v511 = vadd.f32 0.0, %v510
    %v512 = vpop.f32.mrb[0].mxu0
    %513 = vmatprep.mubr.bf16.mxu0 0
    %514 = vmatmul.mubr.bf16.gmra.mrb[0].mxu0 %v307
    %v515 = vpop.f32.mrb[0].mxu0
    %v516 = vadd.f32 0.0, %v515
    %v517 = vpop.f32.mrb[0].mxu0
    %v518 = vpop.f32.mrb[0].mxu0
    %v519 = vadd.f32 0.0, %v518
    %v520 = vpop.f32.mrb[0].mxu0
    %521 = vmatprep.mubr.bf16.mxu0 0
    %522 = vmatmul.mubr.bf16.gmra.mrb[0].mxu0 %v310
    %v523 = vpop.f32.mrb[0].mxu0
    %v524 = vadd.f32 0.0, %v523
    %v525 = vpop.f32.mrb[0].mxu0
    %v526 = vpop.f32.mrb[0].mxu0
    %v527 = vadd.f32 0.0, %v526
    %v528 = vpop.f32.mrb[0].mxu0
    %529 = vmatprep.mubr.bf16.mxu0 0
    %530 = vmatmul.mubr.bf16.gmra.mrb[0].mxu0 %v313
    %v531 = vpop.f32.mrb[0].mxu0
    %v532 = vadd.f32 0.0, %v531
    %v533 = vpop.f32.mrb[0].mxu0
    %v534 = vpop.f32.mrb[0].mxu0
    %v535 = vadd.f32 0.0, %v534
    %v536 = vpop.f32.mrb[0].mxu0
    %537 = vmatprep.mubr.bf16.mxu0 0
    %538 = vmatmul.mubr.bf16.gmra.mrb[0].mxu0 %v316
    %v539 = vpop.f32.mrb[0].mxu0
    %v540 = vadd.f32 0.0, %v539
    %v541 = vpop.f32.mrb[0].mxu0
    %v542 = vpop.f32.mrb[0].mxu0
    %v543 = vadd.f32 0.0, %v542
    %v544 = vpop.f32.mrb[0].mxu0
    %545 = vmatprep.mubr.bf16.mxu0 0
    %546 = vmatmul.mubr.bf16.gmra.mrb[0].mxu0 %v319
    %v547 = vpop.f32.mrb[0].mxu0
    %v548 = vadd.f32 0.0, %v547
    %v549 = vpop.f32.mrb[0].mxu0
    %v550 = vpop.f32.mrb[0].mxu0
    %v551 = vadd.f32 0.0, %v550
    %v552 = vpop.f32.mrb[0].mxu0
    %553 = vmatprep.mubr.bf16.mxu0 0
    %554 = vmatmul.mubr.bf16.gmra.mrb[0].mxu0 %v322
    %v555 = vpop.f32.mrb[0].mxu0
    %v556 = vadd.f32 0.0, %v555
    %v557 = vpop.f32.mrb[0].mxu0
    %v558 = vpop.f32.mrb[0].mxu0
    %v559 = vadd.f32 0.0, %v558
    %v560 = vpop.f32.mrb[0].mxu0
    %561 = vmatprep.mubr.bf16.mxu0 0
    %562 = vmatmul.mubr.bf16.gmra.mrb[0].mxu0 %v325
    %v563 = vpop.f32.mrb[0].mxu0
    %v564 = vadd.f32 0.0, %v563
    %v565 = vpop.f32.mrb[0].mxu0
    %v566 = vpop.f32.mrb[0].mxu0
    %v567 = vadd.f32 0.0, %v566
    %v568 = vpop.f32.mrb[0].mxu0
    %569 = vmatprep.mubr.bf16.mxu0 0
    %570 = vmatmul.mubr.bf16.gmra.mrb[0].mxu0 %v328
    %v571 = vpop.f32.mrb[0].mxu0
    %v572 = vadd.f32 0.0, %v571
    %v573 = vpop.f32.mrb[0].mxu0
    %v574 = vpop.f32.mrb[0].mxu0
    %v575 = vadd.f32 0.0, %v574
    %v576 = vpop.f32.mrb[0].mxu0
    %577 = vmatprep.mubr.bf16.mxu0 0
    %578 = vmatmul.mubr.bf16.gmra.mrb[0].mxu0 %v331
    %v579 = vpop.f32.mrb[0].mxu0
    %v580 = vadd.f32 0.0, %v579
    %v581 = vpop.f32.mrb[0].mxu0
    %v582 = vpop.f32.mrb[0].mxu0
    %v583 = vadd.f32 0.0, %v582
    %v584 = vpop.f32.mrb[0].mxu0
    %585 = vmatprep.mubr.bf16.mxu0 0
    %586 = vmatmul.mubr.bf16.gmra.mrb[0].mxu0 %v334
    %v587 = vpop.f32.mrb[0].mxu0
    %v588 = vadd.f32 0.0, %v587
    %v589 = vpop.f32.mrb[0].mxu0
    %v590 = vpop.f32.mrb[0].mxu0
    %v591 = vadd.f32 0.0, %v590
    %v592 = vpop.f32.mrb[0].mxu0
    %593 = vmatprep.mubr.bf16.mxu0 0
    %594 = vmatmul.mubr.bf16.gmra.mrb[0].mxu0 %v337
    %v595 = vpop.f32.mrb[0].mxu0
    %v596 = vadd.f32 0.0, %v595
    %v597 = vpop.f32.mrb[0].mxu0
    %v598 = vpop.f32.mrb[0].mxu0
    %v599 = vadd.f32 0.0, %v598
    %v600 = vpop.f32.mrb[0].mxu0
    %601 = vmatprep.mubr.bf16.mxu0 0
    %602 = vmatmul.mubr.bf16.gmra.mrb[0].mxu0 %v340
    %v603 = vpop.f32.mrb[0].mxu0
    %v604 = vadd.f32 0.0, %v603
    %v605 = vpop.f32.mrb[0].mxu0
    %v606 = vpop.f32.mrb[0].mxu0
    %v607 = vadd.f32 0.0, %v606
    %v608 = vpop.f32.mrb[0].mxu0
    %609 = vmatprep.mubr.bf16.mxu0 0
    %610 = vmatmul.mubr.bf16.gmra.mrb[0].mxu0 %v343
    %v611 = vpop.f32.mrb[0].mxu0
    %v612 = vadd.f32 0.0, %v611
    %v613 = vpop.f32.mrb[0].mxu0
    %v614 = vpop.f32.mrb[0].mxu0
    %v615 = vadd.f32 0.0, %v614
    %v616 = vpop.f32.mrb[0].mxu0
    %617 = vmatprep.mubr.bf16.mxu0 0
    %618 = vmatmul.mubr.bf16.gmra.mrb[0].mxu0 %v346
    %v619 = vpop.f32.mrb[0].mxu0
    %v620 = vadd.f32 0.0, %v619
    %v621 = vpop.f32.mrb[0].mxu0
    %v622 = vpop.f32.mrb[0].mxu0
    %v623 = vadd.f32 0.0, %v622
    %v624 = vpop.f32.mrb[0].mxu0
    %625 = vmatprep.mubr.bf16.mxu0 0
    %626 = vmatmul.mubr.bf16.gmra.mrb[0].mxu0 %v349
    %v627 = vpop.f32.mrb[0].mxu0
    %v628 = vadd.f32 0.0, %v627
    %v629 = vpop.f32.mrb[0].mxu0
    %v630 = vpop.f32.mrb[0].mxu0
    %v631 = vadd.f32 0.0, %v630
    %v632 = vpop.f32.mrb[0].mxu0
    %633 = vmatprep.mubr.bf16.mxu0 0
    %634 = vmatmul.mubr.bf16.gmra.mrb[0].mxu0 %v352
    %v635 = vpop.f32.mrb[0].mxu0
    %v636 = vadd.f32 0.0, %v635
    %v637 = vpop.f32.mrb[0].mxu0
    %v638 = vpop.f32.mrb[0].mxu0
    %v639 = vadd.f32 0.0, %v638
    %v640 = vpop.f32.mrb[0].mxu0
    %641 = vmatprep.mubr.bf16.mxu0 0
    %642 = vmatmul.mubr.bf16.gmra.mrb[0].mxu0 %v355
    %v643 = vpop.f32.mrb[0].mxu0
    %v644 = vadd.f32 0.0, %v643
    %v645 = vpop.f32.mrb[0].mxu0
    %v646 = vpop.f32.mrb[0].mxu0
    %v647 = vadd.f32 0.0, %v646
    %v648 = vpop.f32.mrb[0].mxu0
    %649 = vdwg.mxu0
    %v650 = vld [vmem:[%s2] sm:$0x1]
    %v651 = vlaneseq
    %v652 = vshrl.u32 %v651, 7
    %v653 = vsub.s32 0, %v652
    %v654 = vrot.slane %v650, %v653
    %v655 = vmul.f32 %v396, %v654
    %v656 = vmul.f32 %v399, %v654
    %v657 = vmul.f32 %v404, %v654
    %v658 = vmul.f32 %v407, %v654
    %v659 = vmul.f32 %v412, %v654
    %v660 = vmul.f32 %v415, %v654
    %v661 = vmul.f32 %v420, %v654
    %v662 = vmul.f32 %v423, %v654
    %v663 = vmul.f32 %v428, %v654
    %v664 = vmul.f32 %v431, %v654
    %v665 = vmul.f32 %v436, %v654
    %v666 = vmul.f32 %v439, %v654
    %v667 = vmul.f32 %v444, %v654
    %v668 = vmul.f32 %v447, %v654
    %v669 = vmul.f32 %v452, %v654
    %v670 = vmul.f32 %v455, %v654
    %v671 = vmul.f32 %v460, %v654
    %v672 = vmul.f32 %v463, %v654
    %v673 = vmul.f32 %v468, %v654
    %v674 = vmul.f32 %v471, %v654
    %v675 = vmul.f32 %v476, %v654
    %v676 = vmul.f32 %v479, %v654
    %v677 = vmul.f32 %v484, %v654
    %v678 = vmul.f32 %v487, %v654
    %v679 = vmul.f32 %v492, %v654
    %v680 = vmul.f32 %v495, %v654
    %v681 = vmul.f32 %v500, %v654
    %v682 = vmul.f32 %v503, %v654
    %v683 = vmul.f32 %v508, %v654
    %v684 = vmul.f32 %v511, %v654
    %v685 = vmul.f32 %v516, %v654
    %v686 = vmul.f32 %v519, %v654
    %v687 = vmul.f32 %v524, %v654
    %v688 = vmul.f32 %v527, %v654
    %v689 = vmul.f32 %v532, %v654
    %v690 = vmul.f32 %v535, %v654
    %v691 = vmul.f32 %v540, %v654
    %v692 = vmul.f32 %v543, %v654
    %v693 = vmul.f32 %v548, %v654
    %v694 = vmul.f32 %v551, %v654
    %v695 = vmul.f32 %v556, %v654
    %v696 = vmul.f32 %v559, %v654
    %v697 = vmul.f32 %v564, %v654
    %v698 = vmul.f32 %v567, %v654
    %v699 = vmul.f32 %v572, %v654
    %v700 = vmul.f32 %v575, %v654
    %v701 = vmul.f32 %v580, %v654
    %v702 = vmul.f32 %v583, %v654
    %v703 = vmul.f32 %v588, %v654
    %v704 = vmul.f32 %v591, %v654
    %v705 = vmul.f32 %v596, %v654
    %v706 = vmul.f32 %v599, %v654
    %v707 = vmul.f32 %v604, %v654
    %v708 = vmul.f32 %v607, %v654
    %v709 = vmul.f32 %v612, %v654
    %v710 = vmul.f32 %v615, %v654
    %v711 = vmul.f32 %v620, %v654
    %v712 = vmul.f32 %v623, %v654
    %v713 = vmul.f32 %v628, %v654
    %v714 = vmul.f32 %v631, %v654
    %v715 = vmul.f32 %v636, %v654
    %v716 = vmul.f32 %v639, %v654
    %v717 = vmul.f32 %v644, %v654
    %v718 = vmul.f32 %v647, %v654
    %v719 = vld [vmem:[%s2 + $0x1] sm:$0x1]
    %v720 = vlaneseq
    %v721 = vshrl.u32 %v720, 7
    %v722 = vsub.s32 0, %v721
    %v723 = vrot.slane %v719, %v722
    %v724 = vadd.f32 %v655, %v723
    %v725 = vadd.f32 %v656, %v723
    %v726 = vadd.f32 %v657, %v723
    %v727 = vadd.f32 %v658, %v723
    %v728 = vadd.f32 %v659, %v723
    %v729 = vadd.f32 %v660, %v723
    %v730 = vadd.f32 %v661, %v723
    %v731 = vadd.f32 %v662, %v723
    %v732 = vadd.f32 %v663, %v723
    %v733 = vadd.f32 %v664, %v723
    %v734 = vadd.f32 %v665, %v723
    %v735 = vadd.f32 %v666, %v723
    %v736 = vadd.f32 %v667, %v723
    %v737 = vadd.f32 %v668, %v723
    %v738 = vadd.f32 %v669, %v723
    %v739 = vadd.f32 %v670, %v723
    %v740 = vadd.f32 %v671, %v723
    %v741 = vadd.f32 %v672, %v723
    %v742 = vadd.f32 %v673, %v723
    %v743 = vadd.f32 %v674, %v723
    %v744 = vadd.f32 %v675, %v723
    %v745 = vadd.f32 %v676, %v723
    %v746 = vadd.f32 %v677, %v723
    %v747 = vadd.f32 %v678, %v723
    %v748 = vadd.f32 %v679, %v723
    %v749 = vadd.f32 %v680, %v723
    %v750 = vadd.f32 %v681, %v723
    %v751 = vadd.f32 %v682, %v723
    %v752 = vadd.f32 %v683, %v723
    %v753 = vadd.f32 %v684, %v723
    %v754 = vadd.f32 %v685, %v723
    %v755 = vadd.f32 %v686, %v723
    %v756 = vadd.f32 %v687, %v723
    %v757 = vadd.f32 %v688, %v723
    %v758 = vadd.f32 %v689, %v723
    %v759 = vadd.f32 %v690, %v723
    %v760 = vadd.f32 %v691, %v723
    %v761 = vadd.f32 %v692, %v723
    %v762 = vadd.f32 %v693, %v723
    %v763 = vadd.f32 %v694, %v723
    %v764 = vadd.f32 %v695, %v723
    %v765 = vadd.f32 %v696, %v723
    %v766 = vadd.f32 %v697, %v723
    %v767 = vadd.f32 %v698, %v723
    %v768 = vadd.f32 %v699, %v723
    %v769 = vadd.f32 %v700, %v723
    %v770 = vadd.f32 %v701, %v723
    %v771 = vadd.f32 %v702, %v723
    %v772 = vadd.f32 %v703, %v723
    %v773 = vadd.f32 %v704, %v723
    %v774 = vadd.f32 %v705, %v723
    %v775 = vadd.f32 %v706, %v723
    %v776 = vadd.f32 %v707, %v723
    %v777 = vadd.f32 %v708, %v723
    %v778 = vadd.f32 %v709, %v723
    %v779 = vadd.f32 %v710, %v723
    %v780 = vadd.f32 %v711, %v723
    %v781 = vadd.f32 %v712, %v723
    %v782 = vadd.f32 %v713, %v723
    %v783 = vadd.f32 %v714, %v723
    %v784 = vadd.f32 %v715, %v723
    %v785 = vadd.f32 %v716, %v723
    %v786 = vadd.f32 %v717, %v723
    %v787 = vadd.f32 %v718, %v723
    %v788 = vmul.f32 %v724, 0.5
    %v789 = vmul.f32 %v725, 0.5
    %v790 = vmul.f32 %v726, 0.5
    %v791 = vmul.f32 %v727, 0.5
    %v792 = vmul.f32 %v728, 0.5
    %v793 = vmul.f32 %v729, 0.5
    %v794 = vmul.f32 %v730, 0.5
    %v795 = vmul.f32 %v731, 0.5
    %v796 = vmul.f32 %v732, 0.5
    %v797 = vmul.f32 %v733, 0.5
    %v798 = vmul.f32 %v734, 0.5
    %v799 = vmul.f32 %v735, 0.5
    %v800 = vmul.f32 %v736, 0.5
    %v801 = vmul.f32 %v737, 0.5
    %v802 = vmul.f32 %v738, 0.5
    %v803 = vmul.f32 %v739, 0.5
    %v804 = vmul.f32 %v740, 0.5
    %v805 = vmul.f32 %v741, 0.5
    %v806 = vmul.f32 %v742, 0.5
    %v807 = vmul.f32 %v743, 0.5
    %v808 = vmul.f32 %v744, 0.5
    %v809 = vmul.f32 %v745, 0.5
    %v810 = vmul.f32 %v746, 0.5
    %v811 = vmul.f32 %v747, 0.5
    %v812 = vmul.f32 %v748, 0.5
    %v813 = vmul.f32 %v749, 0.5
    %v814 = vmul.f32 %v750, 0.5
    %v815 = vmul.f32 %v751, 0.5
    %v816 = vmul.f32 %v752, 0.5
    %v817 = vmul.f32 %v753, 0.5
    %v818 = vmul.f32 %v754, 0.5
    %v819 = vmul.f32 %v755, 0.5
    %v820 = vmul.f32 %v756, 0.5
    %v821 = vmul.f32 %v757, 0.5
    %v822 = vmul.f32 %v758, 0.5
    %v823 = vmul.f32 %v759, 0.5
    %v824 = vmul.f32 %v760, 0.5
    %v825 = vmul.f32 %v761, 0.5
    %v826 = vmul.f32 %v762, 0.5
    %v827 = vmul.f32 %v763, 0.5
    %v828 = vmul.f32 %v764, 0.5
    %v829 = vmul.f32 %v765, 0.5
    %v830 = vmul.f32 %v766, 0.5
    %v831 = vmul.f32 %v767, 0.5
    %v832 = vmul.f32 %v768, 0.5
    %v833 = vmul.f32 %v769, 0.5
    %v834 = vmul.f32 %v770, 0.5
    %v835 = vmul.f32 %v771, 0.5
    %v836 = vmul.f32 %v772, 0.5
    %v837 = vmul.f32 %v773, 0.5
    %v838 = vmul.f32 %v774, 0.5
    %v839 = vmul.f32 %v775, 0.5
    %v840 = vmul.f32 %v776, 0.5
    %v841 = vmul.f32 %v777, 0.5
    %v842 = vmul.f32 %v778, 0.5
    %v843 = vmul.f32 %v779, 0.5
    %v844 = vmul.f32 %v780, 0.5
    %v845 = vmul.f32 %v781, 0.5
    %v846 = vmul.f32 %v782, 0.5
    %v847 = vmul.f32 %v783, 0.5
    %v848 = vmul.f32 %v784, 0.5
    %v849 = vmul.f32 %v785, 0.5
    %v850 = vmul.f32 %v786, 0.5
    %v851 = vmul.f32 %v787, 0.5
    %v852 = vmul.f32 %v724, 0.70710677
    %v853 = vmul.f32 %v725, 0.70710677
    %v854 = vmul.f32 %v726, 0.70710677
    %v855 = vmul.f32 %v727, 0.70710677
    %v856 = vmul.f32 %v728, 0.70710677
    %v857 = vmul.f32 %v729, 0.70710677
    %v858 = vmul.f32 %v730, 0.70710677
    %v859 = vmul.f32 %v731, 0.70710677
    %v860 = vmul.f32 %v732, 0.70710677
    %v861 = vmul.f32 %v733, 0.70710677
    %v862 = vmul.f32 %v734, 0.70710677
    %v863 = vmul.f32 %v735, 0.70710677
    %v864 = vmul.f32 %v736, 0.70710677
    %v865 = vmul.f32 %v737, 0.70710677
    %v866 = vmul.f32 %v738, 0.70710677
    %v867 = vmul.f32 %v739, 0.70710677
    %v868 = vmul.f32 %v740, 0.70710677
    %v869 = vmul.f32 %v741, 0.70710677
    %v870 = vmul.f32 %v742, 0.70710677
    %v871 = vmul.f32 %v743, 0.70710677
    %v872 = vmul.f32 %v744, 0.70710677
    %v873 = vmul.f32 %v745, 0.70710677
    %v874 = vmul.f32 %v746, 0.70710677
    %v875 = vmul.f32 %v747, 0.70710677
    %v876 = vmul.f32 %v748, 0.70710677
    %v877 = vmul.f32 %v749, 0.70710677
    %v878 = vmul.f32 %v750, 0.70710677
    %v879 = vmul.f32 %v751, 0.70710677
    %v880 = vmul.f32 %v752, 0.70710677
    %v881 = vmul.f32 %v753, 0.70710677
    %v882 = vmul.f32 %v754, 0.70710677
    %v883 = vmul.f32 %v755, 0.70710677
    %v884 = vmul.f32 %v756, 0.70710677
    %v885 = vmul.f32 %v757, 0.70710677
    %v886 = vmul.f32 %v758, 0.70710677
    %v887 = vmul.f32 %v759, 0.70710677
    %v888 = vmul.f32 %v760, 0.70710677
    %v889 = vmul.f32 %v761, 0.70710677
    %v890 = vmul.f32 %v762, 0.70710677
    %v891 = vmul.f32 %v763, 0.70710677
    %v892 = vmul.f32 %v764, 0.70710677
    %v893 = vmul.f32 %v765, 0.70710677
    %v894 = vmul.f32 %v766, 0.70710677
    %v895 = vmul.f32 %v767, 0.70710677
    %v896 = vmul.f32 %v768, 0.70710677
    %v897 = vmul.f32 %v769, 0.70710677
    %v898 = vmul.f32 %v770, 0.70710677
    %v899 = vmul.f32 %v771, 0.70710677
    %v900 = vmul.f32 %v772, 0.70710677
    %v901 = vmul.f32 %v773, 0.70710677
    %v902 = vmul.f32 %v774, 0.70710677
    %v903 = vmul.f32 %v775, 0.70710677
    %v904 = vmul.f32 %v776, 0.70710677
    %v905 = vmul.f32 %v777, 0.70710677
    %v906 = vmul.f32 %v778, 0.70710677
    %v907 = vmul.f32 %v779, 0.70710677
    %v908 = vmul.f32 %v780, 0.70710677
    %v909 = vmul.f32 %v781, 0.70710677
    %v910 = vmul.f32 %v782, 0.70710677
    %v911 = vmul.f32 %v783, 0.70710677
    %v912 = vmul.f32 %v784, 0.70710677
    %v913 = vmul.f32 %v785, 0.70710677
    %v914 = vmul.f32 %v786, 0.70710677
    %v915 = vmul.f32 %v787, 0.70710677
    %v916 = verf.f32.pop %v852
    %v917 = verf.f32.pop %v853
    %v918 = verf.f32.pop %v854
    %v919 = verf.f32.pop %v855
    %v920 = verf.f32.pop %v856
    %v921 = verf.f32.pop %v857
    %v922 = verf.f32.pop %v858
    %v923 = verf.f32.pop %v859
    %v924 = verf.f32.pop %v860
    %v925 = verf.f32.pop %v861
    %v926 = verf.f32.pop %v862
    %v927 = verf.f32.pop %v863
    %v928 = verf.f32.pop %v864
    %v929 = verf.f32.pop %v865
    %v930 = verf.f32.pop %v866
    %v931 = verf.f32.pop %v867
    %v932 = verf.f32.pop %v868
    %v933 = verf.f32.pop %v869
    %v934 = verf.f32.pop %v870
    %v935 = verf.f32.pop %v871
    %v936 = verf.f32.pop %v872
    %v937 = verf.f32.pop %v873
    %v938 = verf.f32.pop %v874
    %v939 = verf.f32.pop %v875
    %v940 = verf.f32.pop %v876
    %v941 = verf.f32.pop %v877
    %v942 = verf.f32.pop %v878
    %v943 = verf.f32.pop %v879
    %v944 = verf.f32.pop %v880
    %v945 = verf.f32.pop %v881
    %v946 = verf.f32.pop %v882
    %v947 = verf.f32.pop %v883
    %v948 = verf.f32.pop %v884
    %v949 = verf.f32.pop %v885
    %v950 = verf.f32.pop %v886
    %v951 = verf.f32.pop %v887
    %v952 = verf.f32.pop %v888
    %v953 = verf.f32.pop %v889
    %v954 = verf.f32.pop %v890
    %v955 = verf.f32.pop %v891
    %v956 = verf.f32.pop %v892
    %v957 = verf.f32.pop %v893
    %v958 = verf.f32.pop %v894
    %v959 = verf.f32.pop %v895
    %v960 = verf.f32.pop %v896
    %v961 = verf.f32.pop %v897
    %v962 = verf.f32.pop %v898
    %v963 = verf.f32.pop %v899
    %v964 = verf.f32.pop %v900
    %v965 = verf.f32.pop %v901
    %v966 = verf.f32.pop %v902
    %v967 = verf.f32.pop %v903
    %v968 = verf.f32.pop %v904
    %v969 = verf.f32.pop %v905
    %v970 = verf.f32.pop %v906
    %v971 = verf.f32.pop %v907
    %v972 = verf.f32.pop %v908
    %v973 = verf.f32.pop %v909
    %v974 = verf.f32.pop %v910
    %v975 = verf.f32.pop %v911
    %v976 = verf.f32.pop %v912
    %v977 = verf.f32.pop %v913
    %v978 = verf.f32.pop %v914
    %v979 = verf.f32.pop %v915
    %v980 = vadd.f32 %v916, 1.0
    %v981 = vadd.f32 %v917, 1.0
    %v982 = vadd.f32 %v918, 1.0
    %v983 = vadd.f32 %v919, 1.0
    %v984 = vadd.f32 %v920, 1.0
    %v985 = vadd.f32 %v921, 1.0
    %v986 = vadd.f32 %v922, 1.0
    %v987 = vadd.f32 %v923, 1.0
    %v988 = vadd.f32 %v924, 1.0
    %v989 = vadd.f32 %v925, 1.0
    %v990 = vadd.f32 %v926, 1.0
    %v991 = vadd.f32 %v927, 1.0
    %v992 = vadd.f32 %v928, 1.0
    %v993 = vadd.f32 %v929, 1.0
    %v994 = vadd.f32 %v930, 1.0
    %v995 = vadd.f32 %v931, 1.0
    %v996 = vadd.f32 %v932, 1.0
    %v997 = vadd.f32 %v933, 1.0
    %v998 = vadd.f32 %v934, 1.0
    %v999 = vadd.f32 %v935, 1.0
    %v1000 = vadd.f32 %v936, 1.0
    %v1001 = vadd.f32 %v937, 1.0
    %v1002 = vadd.f32 %v938, 1.0
    %v1003 = vadd.f32 %v939, 1.0
    %v1004 = vadd.f32 %v940, 1.0
    %v1005 = vadd.f32 %v941, 1.0
    %v1006 = vadd.f32 %v942, 1.0
    %v1007 = vadd.f32 %v943, 1.0
    %v1008 = vadd.f32 %v944, 1.0
    %v1009 = vadd.f32 %v945, 1.0
    %v1010 = vadd.f32 %v946, 1.0
    %v1011 = vadd.f32 %v947, 1.0
    %v1012 = vadd.f32 %v948, 1.0
    %v1013 = vadd.f32 %v949, 1.0
    %v1014 = vadd.f32 %v950, 1.0
    %v1015 = vadd.f32 %v951, 1.0
    %v1016 = vadd.f32 %v952, 1.0
    %v1017 = vadd.f32 %v953, 1.0
    %v1018 = vadd.f32 %v954, 1.0
    %v1019 = vadd.f32 %v955, 1.0
    %v1020 = vadd.f32 %v956, 1.0
    %v1021 = vadd.f32 %v957, 1.0
    %v1022 = vadd.f32 %v958, 1.0
    %v1023 = vadd.f32 %v959, 1.0
    %v1024 = vadd.f32 %v960, 1.0
    %v1025 = vadd.f32 %v961, 1.0
    %v1026 = vadd.f32 %v962, 1.0
    %v1027 = vadd.f32 %v963, 1.0
    %v1028 = vadd.f32 %v964, 1.0
    %v1029 = vadd.f32 %v965, 1.0
    %v1030 = vadd.f32 %v966, 1.0
    %v1031 = vadd.f32 %v967, 1.0
    %v1032 = vadd.f32 %v968, 1.0
    %v1033 = vadd.f32 %v969, 1.0
    %v1034 = vadd.f32 %v970, 1.0
    %v1035 = vadd.f32 %v971, 1.0
    %v1036 = vadd.f32 %v972, 1.0
    %v1037 = vadd.f32 %v973, 1.0
    %v1038 = vadd.f32 %v974, 1.0
    %v1039 = vadd.f32 %v975, 1.0
    %v1040 = vadd.f32 %v976, 1.0
    %v1041 = vadd.f32 %v977, 1.0
    %v1042 = vadd.f32 %v978, 1.0
    %v1043 = vadd.f32 %v979, 1.0
    %v1044 = vmul.f32 %v788, %v980
    %v1045 = vmul.f32 %v789, %v981
    %v1046 = vmul.f32 %v790, %v982
    %v1047 = vmul.f32 %v791, %v983
    %v1048 = vmul.f32 %v792, %v984
    %v1049 = vmul.f32 %v793, %v985
    %v1050 = vmul.f32 %v794, %v986
    %v1051 = vmul.f32 %v795, %v987
    %v1052 = vmul.f32 %v796, %v988
    %v1053 = vmul.f32 %v797, %v989
    %v1054 = vmul.f32 %v798, %v990
    %v1055 = vmul.f32 %v799, %v991
    %v1056 = vmul.f32 %v800, %v992
    %v1057 = vmul.f32 %v801, %v993
    %v1058 = vmul.f32 %v802, %v994
    %v1059 = vmul.f32 %v803, %v995
    %v1060 = vmul.f32 %v804, %v996
    %v1061 = vmul.f32 %v805, %v997
    %v1062 = vmul.f32 %v806, %v998
    %v1063 = vmul.f32 %v807, %v999
    %v1064 = vmul.f32 %v808, %v1000
    %v1065 = vmul.f32 %v809, %v1001
    %v1066 = vmul.f32 %v810, %v1002
    %v1067 = vmul.f32 %v811, %v1003
    %v1068 = vmul.f32 %v812, %v1004
    %v1069 = vmul.f32 %v813, %v1005
    %v1070 = vmul.f32 %v814, %v1006
    %v1071 = vmul.f32 %v815, %v1007
    %v1072 = vmul.f32 %v816, %v1008
    %v1073 = vmul.f32 %v817, %v1009
    %v1074 = vmul.f32 %v818, %v1010
    %v1075 = vmul.f32 %v819, %v1011
    %v1076 = vmul.f32 %v820, %v1012
    %v1077 = vmul.f32 %v821, %v1013
    %v1078 = vmul.f32 %v822, %v1014
    %v1079 = vmul.f32 %v823, %v1015
    %v1080 = vmul.f32 %v824, %v1016
    %v1081 = vmul.f32 %v825, %v1017
    %v1082 = vmul.f32 %v826, %v1018
    %v1083 = vmul.f32 %v827, %v1019
    %v1084 = vmul.f32 %v828, %v1020
    %v1085 = vmul.f32 %v829, %v1021
    %v1086 = vmul.f32 %v830, %v1022
    %v1087 = vmul.f32 %v831, %v1023
    %v1088 = vmul.f32 %v832, %v1024
    %v1089 = vmul.f32 %v833, %v1025
    %v1090 = vmul.f32 %v834, %v1026
    %v1091 = vmul.f32 %v835, %v1027
    %v1092 = vmul.f32 %v836, %v1028
    %v1093 = vmul.f32 %v837, %v1029
    %v1094 = vmul.f32 %v838, %v1030
    %v1095 = vmul.f32 %v839, %v1031
    %v1096 = vmul.f32 %v840, %v1032
    %v1097 = vmul.f32 %v841, %v1033
    %v1098 = vmul.f32 %v842, %v1034
    %v1099 = vmul.f32 %v843, %v1035
    %v1100 = vmul.f32 %v844, %v1036
    %v1101 = vmul.f32 %v845, %v1037
    %v1102 = vmul.f32 %v846, %v1038
    %v1103 = vmul.f32 %v847, %v1039
    %v1104 = vmul.f32 %v848, %v1040
    %v1105 = vmul.f32 %v849, %v1041
    %v1106 = vmul.f32 %v850, %v1042
    %v1107 = vmul.f32 %v851, %v1043
    %1108 = vst [vmem:[#allocation2] sm:$0xff] %v1044
    %1109 = vst [vmem:[#allocation2 + $0x8] sm:$0xff] %v1045
    %1110 = vst [vmem:[#allocation2 + $0x10] sm:$0xff] %v1046
    %1111 = vst [vmem:[#allocation2 + $0x18] sm:$0xff] %v1047
    %1112 = vst [vmem:[#allocation2 + $0x20] sm:$0xff] %v1048
    %1113 = vst [vmem:[#allocation2 + $0x28] sm:$0xff] %v1049
    %1114 = vst [vmem:[#allocation2 + $0x30] sm:$0xff] %v1050
    %1115 = vst [vmem:[#allocation2 + $0x38] sm:$0xff] %v1051
    %1116 = vst [vmem:[#allocation2 + $0x40] sm:$0xff] %v1052
    %1117 = vst [vmem:[#allocation2 + $0x48] sm:$0xff] %v1053
    %1118 = vst [vmem:[#allocation2 + $0x50] sm:$0xff] %v1054
    %1119 = vst [vmem:[#allocation2 + $0x58] sm:$0xff] %v1055
    %1120 = vst [vmem:[#allocation2 + $0x60] sm:$0xff] %v1056
    %1121 = vst [vmem:[#allocation2 + $0x68] sm:$0xff] %v1057
    %1122 = vst [vmem:[#allocation2 + $0x70] sm:$0xff] %v1058
    %1123 = vst [vmem:[#allocation2 + $0x78] sm:$0xff] %v1059
    %1124 = vst [vmem:[#allocation2 + $0x80] sm:$0xff] %v1060
    %1125 = vst [vmem:[#allocation2 + $0x88] sm:$0xff] %v1061
    %1126 = vst [vmem:[#allocation2 + $0x90] sm:$0xff] %v1062
    %1127 = vst [vmem:[#allocation2 + $0x98] sm:$0xff] %v1063
    %1128 = vst [vmem:[#allocation2 + $0xa0] sm:$0xff] %v1064
    %1129 = vst [vmem:[#allocation2 + $0xa8] sm:$0xff] %v1065
    %1130 = vst [vmem:[#allocation2 + $0xb0] sm:$0xff] %v1066
    %1131 = vst [vmem:[#allocation2 + $0xb8] sm:$0xff] %v1067
    %1132 = vst [vmem:[#allocation2 + $0xc0] sm:$0xff] %v1068
    %1133 = vst [vmem:[#allocation2 + $0xc8] sm:$0xff] %v1069
    %1134 = vst [vmem:[#allocation2 + $0xd0] sm:$0xff] %v1070
    %1135 = vst [vmem:[#allocation2 + $0xd8] sm:$0xff] %v1071
    %1136 = vst [vmem:[#allocation2 + $0xe0] sm:$0xff] %v1072
    %1137 = vst [vmem:[#allocation2 + $0xe8] sm:$0xff] %v1073
    %1138 = vst [vmem:[#allocation2 + $0xf0] sm:$0xff] %v1074
    %1139 = vst [vmem:[#allocation2 + $0xf8] sm:$0xff] %v1075
    %1140 = vst [vmem:[#allocation2 + $0x100] sm:$0xff] %v1076
    %1141 = vst [vmem:[#allocation2 + $0x108] sm:$0xff] %v1077
    %1142 = vst [vmem:[#allocation2 + $0x110] sm:$0xff] %v1078
    %1143 = vst [vmem:[#allocation2 + $0x118] sm:$0xff] %v1079
    %1144 = vst [vmem:[#allocation2 + $0x120] sm:$0xff] %v1080
    %1145 = vst [vmem:[#allocation2 + $0x128] sm:$0xff] %v1081
    %1146 = vst [vmem:[#allocation2 + $0x130] sm:$0xff] %v1082
    %1147 = vst [vmem:[#allocation2 + $0x138] sm:$0xff] %v1083
    %1148 = vst [vmem:[#allocation2 + $0x140] sm:$0xff] %v1084
    %1149 = vst [vmem:[#allocation2 + $0x148] sm:$0xff] %v1085
    %1150 = vst [vmem:[#allocation2 + $0x150] sm:$0xff] %v1086
    %1151 = vst [vmem:[#allocation2 + $0x158] sm:$0xff] %v1087
    %1152 = vst [vmem:[#allocation2 + $0x160] sm:$0xff] %v1088
    %1153 = vst [vmem:[#allocation2 + $0x168] sm:$0xff] %v1089
    %1154 = vst [vmem:[#allocation2 + $0x170] sm:$0xff] %v1090
    %1155 = vst [vmem:[#allocation2 + $0x178] sm:$0xff] %v1091
    %1156 = vst [vmem:[#allocation2 + $0x180] sm:$0xff] %v1092
    %1157 = vst [vmem:[#allocation2 + $0x188] sm:$0xff] %v1093
    %1158 = vst [vmem:[#allocation2 + $0x190] sm:$0xff] %v1094
    %1159 = vst [vmem:[#allocation2 + $0x198] sm:$0xff] %v1095
    %1160 = vst [vmem:[#allocation2 + $0x1a0] sm:$0xff] %v1096
    %1161 = vst [vmem:[#allocation2 + $0x1a8] sm:$0xff] %v1097
    %1162 = vst [vmem:[#allocation2 + $0x1b0] sm:$0xff] %v1098
    %1163 = vst [vmem:[#allocation2 + $0x1b8] sm:$0xff] %v1099
    %1164 = vst [vmem:[#allocation2 + $0x1c0] sm:$0xff] %v1100
    %1165 = vst [vmem:[#allocation2 + $0x1c8] sm:$0xff] %v1101
    %1166 = vst [vmem:[#allocation2 + $0x1d0] sm:$0xff] %v1102
    %1167 = vst [vmem:[#allocation2 + $0x1d8] sm:$0xff] %v1103
    %1168 = vst [vmem:[#allocation2 + $0x1e0] sm:$0xff] %v1104
    %1169 = vst [vmem:[#allocation2 + $0x1e8] sm:$0xff] %v1105
    %1170 = vst [vmem:[#allocation2 + $0x1f0] sm:$0xff] %v1106
    %1171 = vst [vmem:[#allocation2 + $0x1f8] sm:$0xff] %v1107
    // Predicated region
    $region14: #{tpu_custom_call.1} parent=1 // pred_check
      _
    $region15: #{tpu_custom_call.1} parent=1 // pred_check_branch
      %1173 = sbr.rel (0) target = $region17
    $region16: #{tpu_custom_call.1} parent=1 // pred_region
      %s1175 = ssub.s32 8192, 8192
      %1176 = vsyncadd [#allocation3], %s1175
      %s1177 = sshll.u32 [#allocation2], 4
      %s1178 = int_to_ptr.vmem [resolvable:$true] %s1177
      %1183 = dma.vmem_to_hbm [thread:$0]  %s1178, 8192, %s3, [#allocation3], 128, 128, 8
    $region17: #{tpu_custom_call.1} parent=1 // pred_fallthru
      _
    // Predicated region
    $region18: #{tpu_custom_call.1} parent=1 // pred_check
      _
    $region19: #{tpu_custom_call.1} parent=1 // pred_check_branch
      %1185 = sbr.rel (0) target = $region21
    $region20: #{tpu_custom_call.1} parent=1 // pred_region
      %1186 = dma.done [#allocation3], 8192
    $region21: #{tpu_custom_call.1} parent=1 // pred_fallthru
      _
    %1187 = vsyncpa [#allocation3], 1

</llo_original>
